<compile_context>
chip_gen: v7x
topology: tpu7x:2x2x1
jax: 0.10.0
libtpu: 0.0.40
codegen_flags: <defaults>
</compile_context>

<pallas_src>
import jax
import jax.numpy as jnp
from jax.experimental import pallas as pl
from jax.experimental.pallas import tpu as pltpu


def _make_multi_task_ce_kernel(n_rows: int, tile_rows: int, inv_batch: float):
    """Per-block kernel: partial sum of row losses over a (tile_rows, C) slab.

    row_loss = logsumexp(logits_row) - logits_row[label]; each block writes its
    (1/B)-scaled partial sum to its own output tile so the grid axis can be
    'parallel' (megacore-friendly on v7x).
    """

    def kernel(logits_ref, labels_ref, out_ref):
        logits = logits_ref[...].astype(jnp.float32)      # (tile_rows, C)
        labels = labels_ref[...]                          # (tile_rows, 1) int32
        tn, c = logits.shape

        # Numerically-stable logsumexp over the class (lane) axis.
        m = jnp.max(logits, axis=-1, keepdims=True)                          # (tn, 1)
        lse = jnp.log(jnp.sum(jnp.exp(logits - m), axis=-1, keepdims=True)) + m

        # Gather logit at the label index: masked select + lane reduction
        # (no dynamic gather on TPU; stays on VPU/XLU).
        class_ids = jax.lax.broadcasted_iota(jnp.int32, (tn, c), 1)          # (tn, C)
        picked = jnp.sum(jnp.where(class_ids == labels, logits, 0.0),
                         axis=-1, keepdims=True)                             # (tn, 1)

        row_loss = lse - picked                                              # (tn, 1)

        # Mask padded tail rows of the final (partial) block: their contents are
        # undefined and must not contribute (could be NaN/Inf).
        row_ids = (pl.program_id(0) * tile_rows
                   + jax.lax.broadcasted_iota(jnp.int32, (tn, 1), 0))
        row_loss = jnp.where(row_ids < n_rows, row_loss, 0.0)

        partial = jnp.sum(row_loss) * inv_batch
        # Lane-dense, (8,128)-aligned store; wrapper picks element [i, 0, 0].
        out_ref[...] = jnp.full((1, 8, 128), partial, dtype=jnp.float32)

    return kernel


def multi_task_ce_loss(preds_stacked, labels_flat, *, tile_rows=None):
    """preds_stacked: (T, B, C) float logits (stacked per-task preds).
       labels_flat:   (T*B,) int class indices (mirrors the PyTorch reshape)."""
    T, B, C = preds_stacked.shape
    N = T * B
    # Keep the model's native dtype in HBM (bf16 halves DMA bytes on the
    # mem-bound v5e/v6e path); the f32 upcast happens inside the kernel.
    logits = preds_stacked.reshape(N, C)
    labels = labels_flat.reshape(N, 1).astype(jnp.int32)
    itemsize = jnp.dtype(logits.dtype).itemsize

    if tile_rows is None:
        # ~4 MiB of logits per buffer; with double-buffering plus the
        # lane-padded labels tile this stays well under v7x's VMEM budget.
        budget = 4 * 1024 * 1024
        tile_rows = min(2048, max(8, budget // max(1, C * itemsize)))
    if tile_rows >= N:
        tile_rows = N                                # single full-extent block
    else:
        tile_rows = max(8, (tile_rows // 8) * 8)     # sublane-aligned tile
    num_blocks = pl.cdiv(N, tile_rows)

    out = pl.pallas_call(
        _make_multi_task_ce_kernel(N, tile_rows, 1.0 / B),
        out_shape=jax.ShapeDtypeStruct((num_blocks, 8, 128), jnp.float32),
        grid=(num_blocks,),
        in_specs=[
            pl.BlockSpec((tile_rows, C), lambda i: (i, 0)),
            pl.BlockSpec((tile_rows, 1), lambda i: (i, 0)),
        ],
        out_specs=pl.BlockSpec((1, 8, 128), lambda i: (i, 0, 0)),
        compiler_params=pltpu.CompilerParams(
            dimension_semantics=("parallel",),
            vmem_limit_bytes=32 * 1024 * 1024,
        ),
        cost_estimate=pl.CostEstimate(
            flops=5 * N * C,
            transcendentals=N * C,
            bytes_accessed=N * C * itemsize + 4 * N + num_blocks * 8 * 128 * 4,
        ),
    )(logits, labels)

    # Per-block partials -> scalar (tiny XLA reduction over num_blocks).
    return jnp.sum(out[:, 0, 0])


def _reference_loss(preds_stacked, labels_flat):
    T, B, C = preds_stacked.shape
    labels = labels_flat.reshape(T, B)
    logits = preds_stacked.astype(jnp.float32)
    lse = jax.scipy.special.logsumexp(logits, axis=-1)                       # (T, B)
    picked = jnp.take_along_axis(logits, labels[..., None], axis=-1)[..., 0]
    return jnp.sum(jnp.mean(lse - picked, axis=-1))


if __name__ == "__main__":
    # "Multi-Task loss for two attributes only" -> 2 tasks.
    T, B, C = 2, 8, 16
    key = jax.random.PRNGKey(0)
    k_pred, k_lab = jax.random.split(key)

    # preds is a list of per-task logits in the PyTorch module; stack here (glue).
    preds_list = [
        jax.random.normal(jax.random.fold_in(k_pred, i), (B, C), dtype=jnp.float32)
        for i in range(T)
    ]
    preds_stacked = jnp.stack(preds_list, axis=0)                            # (T, B, C)
    labels_flat = jax.random.randint(k_lab, (T * B,), 0, C, dtype=jnp.int32)

    loss = multi_task_ce_loss(preds_stacked, labels_flat)
    loss = jax.block_until_ready(loss)

    ref = _reference_loss(preds_stacked, labels_flat)
    assert jnp.allclose(loss, ref, rtol=1e-5, atol=1e-5), (loss, ref)

    print("KERNEL_OK")
</pallas_src>

<mosaic_0001>
module attributes {stable_mosaic.version = 11 : i64} {
  func.func @kernel(%arg0: i32, %arg1: memref<16x16xf32, #tpu.memory_space<vmem>>, %arg2: memref<16x1xi32, #tpu.memory_space<vmem>>, %arg3: memref<1x8x128xf32, #tpu.memory_space<vmem>>) attributes {dimension_semantics = [#tpu.dimension_semantics<parallel>], iteration_bounds = array<i64: 1>, scalar_prefetch = 0 : i64, scratch_operands = 0 : i64, tpu.core_type = #tpu.core_type<tc>, window_params = [{transform_indices = @transform_0, window_bounds = array<i64: 16, 16>}, {transform_indices = @transform_1, window_bounds = array<i64: 16, 1>}, {transform_indices = @transform_2, window_bounds = array<i64: 1, 8, 128>}]} {
    %c0 = arith.constant 0 : index
    %c0_0 = arith.constant 0 : index
    %0 = vector.load %arg1[%c0, %c0_0] : memref<16x16xf32, #tpu.memory_space<vmem>>, vector<16x16xf32>
    %c0_1 = arith.constant 0 : index
    %c0_2 = arith.constant 0 : index
    %1 = vector.load %arg2[%c0_1, %c0_2] : memref<16x1xi32, #tpu.memory_space<vmem>>, vector<16x1xi32>
    %cst = arith.constant dense<0xFF800000> : vector<16xf32>
    %2 = vector.multi_reduction <maximumf>, %0, %cst [1] : vector<16x16xf32> to vector<16xf32>
    %3 = vector.shape_cast %2 : vector<16xf32> to vector<16x1xf32>
    %4 = vector.broadcast %3 : vector<16x1xf32> to vector<16x16xf32>
    %5 = arith.subf %0, %4 : vector<16x16xf32>
    %6 = math.exp %5 : vector<16x16xf32>
    %cst_3 = arith.constant dense<0.000000e+00> : vector<16xf32>
    %7 = vector.multi_reduction <add>, %6, %cst_3 [1] : vector<16x16xf32> to vector<16xf32>
    %8 = vector.shape_cast %7 : vector<16xf32> to vector<16x1xf32>
    %9 = math.log %8 : vector<16x1xf32>
    %10 = arith.addf %9, %3 : vector<16x1xf32>
    %11 = tpu.iota {dimensions = array<i32: 1>} : vector<16x16xi32>
    %12 = vector.broadcast %1 : vector<16x1xi32> to vector<16x16xi32>
    %13 = arith.cmpi eq, %11, %12 : vector<16x16xi32>
    %cst_4 = arith.constant 0.000000e+00 : f32
    %14 = vector.broadcast %cst_4 : f32 to vector<16x16xf32>
    %15 = arith.select %13, %0, %14 : vector<16x16xi1>, vector<16x16xf32>
    %cst_5 = arith.constant dense<0.000000e+00> : vector<16xf32>
    %16 = vector.multi_reduction <add>, %15, %cst_5 [1] : vector<16x16xf32> to vector<16xf32>
    %17 = vector.shape_cast %16 : vector<16xf32> to vector<16x1xf32>
    %18 = arith.subf %10, %17 : vector<16x1xf32>
    %c16_i32 = arith.constant 16 : i32
    %19 = arith.muli %arg0, %c16_i32 : i32
    %20 = tpu.iota {dimensions = array<i32: 0>} : vector<16x1xi32>
    %21 = vector.broadcast %19 : i32 to vector<16x1xi32>
    %22 = arith.addi %21, %20 : vector<16x1xi32>
    %c16_i32_6 = arith.constant 16 : i32
    %23 = vector.broadcast %c16_i32_6 : i32 to vector<16x1xi32>
    %24 = arith.cmpi slt, %22, %23 : vector<16x1xi32>
    %cst_7 = arith.constant 0.000000e+00 : f32
    %25 = vector.broadcast %cst_7 : f32 to vector<16x1xf32>
    %26 = arith.select %24, %18, %25 : vector<16x1xi1>, vector<16x1xf32>
    %27 = vector.shape_cast %26 : vector<16x1xf32> to vector<1x16x1xf32>
    %cst_8 = arith.constant dense<0.000000e+00> : vector<1xf32>
    %28 = vector.multi_reduction <add>, %27, %cst_8 [1, 2] : vector<1x16x1xf32> to vector<1xf32>
    %29 = vector.shape_cast %28 : vector<1xf32> to vector<1x1x1xf32>
    %30 = vector.extract %29[0, 0, 0] : f32 from vector<1x1x1xf32>
    %cst_9 = arith.constant 1.250000e-01 : f32
    %31 = arith.mulf %30, %cst_9 : f32
    %32 = vector.broadcast %31 : f32 to vector<1x8x128xf32>
    %c0_10 = arith.constant 0 : index
    %c0_11 = arith.constant 0 : index
    %c0_12 = arith.constant 0 : index
    %33 = vector.load %arg3[%c0_10, %c0_11, %c0_12] : memref<1x8x128xf32, #tpu.memory_space<vmem>>, vector<1x8x128xf32>
    tpu.vector_store %arg3[%c0_10, %c0_11, %c0_12], %32 {strides = array<i32>} : memref<1x8x128xf32, #tpu.memory_space<vmem>>, vector<1x8x128xf32>,
    return
  }
  func.func @transform_0(%arg0: i32) -> (i32, i32) {
    %c0_i32 = arith.constant 0 : i32
    %c0_i32_0 = arith.constant 0 : i32
    return %arg0, %c0_i32 : i32, i32
  }
  func.func @transform_1(%arg0: i32) -> (i32, i32) {
    %c0_i32 = arith.constant 0 : i32
    %c0_i32_0 = arith.constant 0 : i32
    return %arg0, %c0_i32 : i32, i32
  }
  func.func @transform_2(%arg0: i32) -> (i32, i32, i32) {
    %c0_i32 = arith.constant 0 : i32
    %c0_i32_0 = arith.constant 0 : i32
    %c0_i32_1 = arith.constant 0 : i32
    return %arg0, %c0_i32, %c0_i32_0 : i32, i32, i32
  }
}

</mosaic_0001>

<llo_original>
// kernel: tpu_custom_call.1
$region0: #{tpu_custom_call.1}
  #allocation0 [shape = 'u32[]', space=smem, size = 0x4, offset = 0x4, fixed_abs, tag = 'smem constant byte address 0x4 - core index']
  #allocation1 [shape = 'u32[144,128]{1,0:T(1,128)}', space=vmem, size = 0x12000, scoped, tag = 'internal scratch']
  %s0 = inlined_call_operand.vmem [shape: f32[16,16], index: 0, kind: input, shape index: {}]
  %s1 = inlined_call_operand.vmem [shape: s32[16,1], index: 1, kind: input, shape index: {}]
  %s2 = inlined_call_operand.hbm [shape: f32[1,8,128], index: 2, kind: output, shape index: {}]
  %s3 = sld [smem:[#allocation0]]
  $region18: #{tpu_custom_call.1} parent=0
    _
  %s5 = ssub.s32 1, %s3
  %s6 = scalar_select 0, %s5, %s3
  $region1: #{tpu_custom_call.1} parent=0
    #allocation2 [shape = 'u8[4096]{0}', space=vmem, size = 0x1000, scoped, tag = 'output window, operand 0, single buffered']
    #allocation3 [shape = 's32[1]{0}', space=sflag, size = 0x4, scoped, tag = 'scoped memory for tpu_custom_call.1']
    %7 = vsyncpa [#allocation3], 0
    // Predicated region
    $region2: #{tpu_custom_call.1} parent=1 // pred_check
      _
    $region3: #{tpu_custom_call.1} parent=1 // pred_check_branch
      %9 = sbr.rel (0) target = $region5
    $region4: #{tpu_custom_call.1} parent=1 // pred_region
      _
    $region5: #{tpu_custom_call.1} parent=1 // pred_fallthru
      _
    // Predicated region
    $region6: #{tpu_custom_call.1} parent=1 // pred_check
      _
    $region7: #{tpu_custom_call.1} parent=1 // pred_check_branch
      %11 = sbr.rel (0) target = $region9
    $region8: #{tpu_custom_call.1} parent=1 // pred_region
      _
    $region9: #{tpu_custom_call.1} parent=1 // pred_fallthru
      _
    %v12 = vld [vmem:[%s0] sm:$0xff]
    %v13 = vld [vmem:[%s0 + $0x8] sm:$0xff]
    %v14 = vld [vmem:[%s1] sm:$0xff]
    %v15 = vld [vmem:[%s1 + $0x8] sm:$0xff]
    %vm16 = vcmask 130048
    %v17 = vsel %vm16, %v12, -inf
    %18 = vmax.xlane.f32.xlu0 %v17
    %v19 = vpop.xlane.xlu0 %18
    %v20 = vsel %vm16, %v13, -inf
    %21 = vmax.xlane.f32.xlu0 %v20
    %v22 = vpop.xlane.xlu0 %21
    %v23 = vsub.f32 %v12, %v19
    %v24 = vsub.f32 %v13, %v22
    %v25 = vmul.f32 %v23, 1.442695
    %v26 = vpow.pop %v25
    %v27 = vmul.f32 %v24, 1.442695
    %v28 = vpow.pop %v27
    %v29 = vsel %vm16, %v26, 0.0
    %30 = vadd.xlane.f32.xlu0 %v29
    %v31 = vpop.xlane.xlu0 %30
    %v32 = vsel %vm16, %v28, 0.0
    %33 = vadd.xlane.f32.xlu0 %v32
    %v34 = vpop.xlane.xlu0 %33
    %v35 = vlog2.pop %v31
    %v36 = vmul.f32 %v35, 0.6931472
    %v37 = vlog2.pop %v34
    %v38 = vmul.f32 %v37, 0.6931472
    %v39 = vadd.f32 %v36, %v19
    %v40 = vadd.f32 %v38, %v22
    %v41 = vlaneseq
    %v42 = vand.u32 %v41, 127
    %43 = vset.pattern.permute.xlu0 0
    %44 = vperm.xlu0 %43, %v14
    %v45 = vpop.permute.xlu0 %44
    %46 = vset.pattern.permute.xlu0 0
    %47 = vperm.xlu0 %46, %v15
    %v48 = vpop.permute.xlu0 %47
    %vm49 = vcmp.eq.s32.totalorder %v42, %v45
    %vm50 = vcmp.eq.s32.totalorder %v42, %v48
    %v51 = vsel %vm49, %v12, 0.0
    %v52 = vsel %vm50, %v13, 0.0
    %v53 = vsel %vm16, %v51, 0.0
    %54 = vadd.xlane.f32.xlu0 %v53
    %v55 = vpop.xlane.xlu0 %54
    %v56 = vsel %vm16, %v52, 0.0
    %57 = vadd.xlane.f32.xlu0 %v56
    %v58 = vpop.xlane.xlu0 %57
    %v59 = vsub.f32 %v39, %v55
    %v60 = vsub.f32 %v40, %v58
    %s61 = smul.u32 0, 16
    %v62 = vlaneseq
    %v63 = vshrl.u32 %v62, 7
    %v64 = vadd.s32 %v63, 8
    %v65 = vstv %s61
    %v66 = vadd.s32 %v65, %v63
    %v67 = vadd.s32 %v65, %v64
    %vm68 = vcmp.lt.s32.totalorder %v66, 16
    %vm69 = vcmp.lt.s32.totalorder %v67, 16
    %v70 = vsel %vm68, %v59, 0.0
    %v71 = vsel %vm69, %v60, 0.0
    %vm72 = vcmask 7168
    %v73 = vsel %vm72, %v70, 0.0
    %v74 = vsel %vm72, %v71, 0.0
    %v75 = vadd.f32 %v73, %v74
    %76 = vadd.xlane.f32.xlu0 %v75
    %v77 = vpop.xlane.xlu0 %76
    %v78 = vrot.slane %v77, 4
    %v79 = vadd.f32 %v77, %v78
    %v80 = vrot.slane %v79, 2
    %v81 = vadd.f32 %v79, %v80
    %v82 = vrot.slane %v81, 1
    %v83 = vadd.f32 %v81, %v82
    %s84 = vtos %v83
    %s85 = smul.f32 %s84, 0.125
    %v86 = vstv %s85
    %87 = vst [vmem:[#allocation2] sm:$0xff] %v86
    // Predicated region
    $region10: #{tpu_custom_call.1} parent=1 // pred_check
      _
    $region11: #{tpu_custom_call.1} parent=1 // pred_check_branch
      %89 = sbr.rel (0) target = $region13
    $region12: #{tpu_custom_call.1} parent=1 // pred_region
      %s91 = ssub.s32 128, 128
      %92 = vsyncadd [#allocation3], %s91
      %s94 = sshll.u32 [#allocation2], 4
      %s95 = int_to_ptr.vmem [resolvable:$true] %s94
      %97 = dma.vmem_to_hbm [thread:$0]  %s95, 128, %s2, [#allocation3]
    $region13: #{tpu_custom_call.1} parent=1 // pred_fallthru
      _
    // Predicated region
    $region14: #{tpu_custom_call.1} parent=1 // pred_check
      _
    $region15: #{tpu_custom_call.1} parent=1 // pred_check_branch
      %99 = sbr.rel (0) target = $region17
    $region16: #{tpu_custom_call.1} parent=1 // pred_region
      %100 = dma.done [#allocation3], 128
    $region17: #{tpu_custom_call.1} parent=1 // pred_fallthru
      _
    %101 = vsyncpa [#allocation3], 1

</llo_original>
